<compile_context>
chip_gen: v5e
topology: v5e:2x2
jax: 0.10.0
libtpu: 0.0.40
codegen_flags: <defaults>
</compile_context>

<pallas_src>
import jax
import jax.numpy as jnp
from jax.experimental import pallas as pl
from jax.experimental.pallas import tpu as pltpu

LANE = 128
TARGET_BLOCK_BYTES = 2 << 20      # ~2 MiB per buffer; x2 bufs x2 arrays = 8 MiB
SINGLE_BLOCK_MAX_BYTES = 4 << 20  # ragged fallback: whole-array single block


def copy_kernel(x_ref, o_ref):
    # Identity copy of one lane-dense tile.
    o_ref[...] = x_ref[...]


def _resolve_size(size, total):
    """torch.view-style size resolution (supports a single -1)."""
    size = tuple(int(s) for s in size)
    if size.count(-1) > 1:
        raise ValueError("only one dimension can be -1")
    if -1 in size:
        known = 1
        for s in size:
            if s != -1:
                known *= s
        size = tuple(total // known if s == -1 else s for s in size)
    prod = 1
    for s in size:
        prod *= s
    if prod != total:
        raise ValueError(f"cannot view {total} elements as {size}")
    return size


def _tiled_copy_2d(flat, total, dtype, itemsize, sublane, width):
    """Copy a 1-D stream of `total` elements laid out lane-dense as (rows, width)."""
    rows = total // width
    if rows <= sublane:
        block_rows = rows                                   # full-extent block
    else:
        block_rows = max(
            sublane,
            (TARGET_BLOCK_BYTES // (width * itemsize)) // sublane * sublane)
        block_rows = min(block_rows,
                         ((rows + sublane - 1) // sublane) * sublane)
    x2d = flat.reshape(rows, width)                          # metadata-only
    out2d = pl.pallas_call(
        copy_kernel,
        out_shape=jax.ShapeDtypeStruct((rows, width), dtype),
        grid=(pl.cdiv(rows, block_rows),),                   # edge block masked
        in_specs=[pl.BlockSpec((block_rows, width), lambda i: (i, 0))],
        out_specs=pl.BlockSpec((block_rows, width), lambda i: (i, 0)),
        compiler_params=pltpu.CompilerParams(
            dimension_semantics=("parallel",)),
    )(x2d)
    return out2d.reshape(-1)


def _lane_dense_copy(flat, total, dtype):
    itemsize = jnp.dtype(dtype).itemsize
    sublane = 8 * max(1, 4 // itemsize)        # f32: 8, bf16: 16, int8: 32

    # Widest lane-dense last dim that exactly divides the element count.
    width = next((w for w in (2048, 1024, 512, 256, 128) if total % w == 0), 0)

    if width == 0:
        # Ragged element count (not a multiple of 128).
        if total * itemsize <= SINGLE_BLOCK_MAX_BYTES:
            # Single full-extent block: one DMA in, one DMA out, no padding.
            x2d = flat.reshape(1, total)
            out = pl.pallas_call(
                copy_kernel,
                out_shape=jax.ShapeDtypeStruct((1, total), dtype),
            )(x2d)
            return out.reshape(-1)
        # Large & ragged: pad only the tail to a full 128-lane row, copy, trim.
        pad = (-total) % LANE
        flat = jnp.pad(flat, (0, pad))
        out = _tiled_copy_2d(flat, total + pad, dtype, itemsize, sublane, LANE)
        return out[:total]

    return _tiled_copy_2d(flat, total, dtype, itemsize, sublane, width)


def view_pallas(x, size):
    """Matches View(size).forward(x) == x.view(size) for contiguous x."""
    total = int(x.size)
    out_dims = _resolve_size(size, total)
    if total == 0:
        return jnp.reshape(x, out_dims)
    flat = jnp.reshape(x, (-1,))                 # metadata-only for contiguous x
    out_flat = _lane_dense_copy(flat, total, x.dtype)
    return out_flat.reshape(out_dims)


if __name__ == "__main__":
    key = jax.random.PRNGKey(0)

    # 1) Typical usage: View(size=(2, -1)) flattening feature maps.
    x = jax.random.normal(key, (2, 4, 16, 16), dtype=jnp.float32)
    out = jax.block_until_ready(view_pallas(x, (2, -1)))
    ref = jnp.reshape(x, (2, -1))
    assert out.shape == ref.shape, (out.shape, ref.shape)
    assert bool(jnp.array_equal(out, ref))

    # 2) Multi-row lane-dense path.
    x2 = jax.random.normal(key, (32, 4, 16, 16), dtype=jnp.float32)
    out2 = jax.block_until_ready(view_pallas(x2, (32, -1)))
    ref2 = jnp.reshape(x2, (32, -1))
    assert out2.shape == ref2.shape
    assert bool(jnp.array_equal(out2, ref2))

    # 3) Ragged element count (105 elements) -> single full-extent block path.
    x3 = jax.random.normal(key, (3, 5, 7), dtype=jnp.float32)
    out3 = jax.block_until_ready(view_pallas(x3, (-1,)))
    ref3 = jnp.reshape(x3, (-1,))
    assert out3.shape == ref3.shape
    assert bool(jnp.array_equal(out3, ref3))

    print("KERNEL_OK")
</pallas_src>

<mosaic_0001>
module attributes {stable_mosaic.version = 11 : i64} {
  func.func @copy_kernel(%arg0: i32, %arg1: memref<1x2048xf32, #tpu.memory_space<vmem>>, %arg2: memref<1x2048xf32, #tpu.memory_space<vmem>>) attributes {dimension_semantics = [#tpu.dimension_semantics<parallel>], iteration_bounds = array<i64: 1>, scalar_prefetch = 0 : i64, scratch_operands = 0 : i64, tpu.core_type = #tpu.core_type<tc>, window_params = [{transform_indices = @transform_0, window_bounds = array<i64: 1, 2048>}, {transform_indices = @transform_1, window_bounds = array<i64: 1, 2048>}]} {
    %c0 = arith.constant 0 : index
    %c0_0 = arith.constant 0 : index
    %0 = vector.load %arg1[%c0, %c0_0] : memref<1x2048xf32, #tpu.memory_space<vmem>>, vector<1x2048xf32>
    %c0_1 = arith.constant 0 : index
    %c0_2 = arith.constant 0 : index
    %1 = vector.load %arg2[%c0_1, %c0_2] : memref<1x2048xf32, #tpu.memory_space<vmem>>, vector<1x2048xf32>
    tpu.vector_store %arg2[%c0_1, %c0_2], %0 {strides = array<i32>} : memref<1x2048xf32, #tpu.memory_space<vmem>>, vector<1x2048xf32>,
    return
  }
  func.func @transform_0(%arg0: i32) -> (i32, i32) {
    %c0_i32 = arith.constant 0 : i32
    %c0_i32_0 = arith.constant 0 : i32
    return %arg0, %c0_i32 : i32, i32
  }
  func.func @transform_1(%arg0: i32) -> (i32, i32) {
    %c0_i32 = arith.constant 0 : i32
    %c0_i32_0 = arith.constant 0 : i32
    return %arg0, %c0_i32 : i32, i32
  }
}

</mosaic_0001>

<llo_original>
// kernel: tpu_custom_call.1
$region0: #{tpu_custom_call.1}
  #allocation0 [shape = 'u32[]', space=smem, size = 0x4, offset = 0x4, fixed_abs, tag = 'smem constant byte address 0x4 - core index']
  #allocation1 [shape = 'u32[72,128]{1,0:T(1,128)}', space=vmem, size = 0x9000, scoped, tag = 'internal scratch']
  %s0 = inlined_call_operand.hbm [shape: f32[1,2048], index: 0, kind: input, shape index: {}]
  %s1 = inlined_call_operand.hbm [shape: f32[1,2048], index: 1, kind: output, shape index: {}]
  %s2 = sld [smem:[#allocation0]]
  $region18: #{tpu_custom_call.1} parent=0
    _
  %s4 = ssub.s32 1, %s2
  %s5 = scalar_select 0, %s4, %s2
  $region1: #{tpu_custom_call.1} parent=0
    #allocation2 [shape = 'u8[8192]{0}', space=vmem, size = 0x2000, scoped, tag = 'input window, operand 0, single buffered']
    #allocation3 [shape = 's32[1]{0}', space=sflag, size = 0x4, scoped, tag = 'scoped memory for tpu_custom_call.1']
    #allocation4 [shape = 's32[1]{0}', space=sflag, size = 0x4, scoped, tag = 'scoped memory for tpu_custom_call.1']
    #allocation5 [shape = 'u8[8192]{0}', space=vmem, size = 0x2000, scoped, tag = 'output window, operand 0, single buffered']
    %6 = vsyncpa [#allocation3], 0
    %7 = vsyncpa [#allocation4], 0
    // Predicated region
    $region2: #{tpu_custom_call.1} parent=1 // pred_check
      _
    $region3: #{tpu_custom_call.1} parent=1 // pred_check_branch
      %9 = sbr.rel (0) target = $region5
    $region4: #{tpu_custom_call.1} parent=1 // pred_region
      %11 = vsyncadd [#allocation3], 0
      %s13 = sshll.u32 %s0, 4
      %s14 = int_to_ptr.hbm [resolvable:$true] %s13
      %s15 = sshll.u32 [#allocation2], 4
      %s16 = int_to_ptr.vmem [resolvable:$true] %s15
      %18 = dma.hbm_to_vmem [thread:$0]  %s14, 256, %s16, [#allocation3]
    $region5: #{tpu_custom_call.1} parent=1 // pred_fallthru
      _
    // Predicated region
    $region6: #{tpu_custom_call.1} parent=1 // pred_check
      _
    $region7: #{tpu_custom_call.1} parent=1 // pred_check_branch
      %20 = sbr.rel (0) target = $region9
    $region8: #{tpu_custom_call.1} parent=1 // pred_region
      %22 = dma.done [#allocation3], 256
    $region9: #{tpu_custom_call.1} parent=1 // pred_fallthru
      _
    %v23 = vld [vmem:[#allocation2] sm:$0xff]
    %v24 = vld [vmem:[#allocation2 + $0x8] sm:$0xff]
    %25 = vst [vmem:[#allocation5] sm:$0xff] %v23
    %26 = vst [vmem:[#allocation5 + $0x8] sm:$0xff] %v24
    // Predicated region
    $region10: #{tpu_custom_call.1} parent=1 // pred_check
      _
    $region11: #{tpu_custom_call.1} parent=1 // pred_check_branch
      %28 = sbr.rel (0) target = $region13
    $region12: #{tpu_custom_call.1} parent=1 // pred_region
      %30 = vsyncadd [#allocation4], 0
      %s32 = sshll.u32 [#allocation5], 4
      %s33 = int_to_ptr.vmem [resolvable:$true] %s32
      %s34 = sshll.u32 %s1, 4
      %s35 = int_to_ptr.hbm [resolvable:$true] %s34
      %37 = dma.vmem_to_hbm [thread:$0]  %s33, 256, %s35, [#allocation4]
    $region13: #{tpu_custom_call.1} parent=1 // pred_fallthru
      _
    // Predicated region
    $region14: #{tpu_custom_call.1} parent=1 // pred_check
      _
    $region15: #{tpu_custom_call.1} parent=1 // pred_check_branch
      %39 = sbr.rel (0) target = $region17
    $region16: #{tpu_custom_call.1} parent=1 // pred_region
      %41 = dma.done [#allocation4], 256
    $region17: #{tpu_custom_call.1} parent=1 // pred_fallthru
      _
    %42 = vsyncpa [#allocation3], 1
    %43 = vsyncpa [#allocation4], 1

</llo_original>
